<compile_context>
chip_gen: v7x
topology: tpu7x:2x2x1
jax: 0.10.0
libtpu: 0.0.40
codegen_flags: <defaults>
</compile_context>

<pallas_src>
import jax
import jax.numpy as jnp
from jax.experimental import pallas as pl
from jax.experimental.pallas import tpu as pltpu


def _round_up(x: int, m: int) -> int:
    return (x + m - 1) // m * m


def _embed_gather_kernel(ids_ref, table_hbm, out_ref, row_buf, sem):
    """One grid step: DMA-gather tile_tok embedding rows from HBM.

    ids_ref:   SMEM (n_tok_p,) int32   all token ids (scalar-prefetched)
    table_hbm: ANY  (V, E)             embedding table, stays in HBM
    out_ref:   VMEM (tile_tok, E)      output block (lane-dense store)
    row_buf:   VMEM (tile_tok, E)      gather landing buffer (scratch)
    sem:       DMA semaphore shared by all row copies of this step
    """
    tile_tok = out_ref.shape[0]
    base = pl.program_id(0) * tile_tok

    def row_copy(t):
        tok = ids_ref[base + t]                         # scalar SMEM read
        return pltpu.make_async_copy(
            table_hbm.at[pl.ds(tok, 1), :],             # (1, E) row in HBM
            row_buf.at[pl.ds(t, 1), :],                 # (1, E) row in VMEM
            sem,
        )

    # Issue every row gather of this tile so all DMAs are in flight at once,
    # then drain. All copies share one semaphore; each wait consumes exactly
    # one (equal-sized) completion.
    @pl.loop(0, tile_tok)
    def _start(t):
        row_copy(t).start()

    @pl.loop(0, tile_tok)
    def _wait(t):
        row_copy(t).wait()

    out_ref[...] = row_buf[...].astype(out_ref.dtype)


def text_embed(token_ids: jax.Array, embed_table: jax.Array,
               *, tile_tok: int = 128) -> jax.Array:
    """Equivalent of TextEmbed.forward: embed_table[token_ids].

    token_ids:   (B, S) integer ids
    embed_table: (V, E)
    returns:     (B, S, E) with embed_table.dtype
    """
    B, S = token_ids.shape
    V, E = embed_table.shape
    n_tok = B * S

    # Shrink the tile for tiny inputs; keep the sublane multiple-of-8 rule.
    tile = min(tile_tok, _round_up(n_tok, 8))
    tile = max(8, _round_up(tile, 8))
    n_tok_p = _round_up(n_tok, tile)

    flat_ids = token_ids.reshape(n_tok).astype(jnp.int32)
    flat_ids = jnp.clip(flat_ids, 0, V - 1)        # bounds safety for DMA addresses
    if n_tok_p != n_tok:
        flat_ids = jnp.pad(flat_ids, (0, n_tok_p - n_tok))  # padded rows gather row 0

    grid = (n_tok_p // tile,)

    out = pl.pallas_call(
        _embed_gather_kernel,
        out_shape=jax.ShapeDtypeStruct((n_tok_p, E), embed_table.dtype),
        grid_spec=pltpu.PrefetchScalarGridSpec(
            num_scalar_prefetch=1,                       # flat_ids -> SMEM
            grid=grid,
            in_specs=[pl.BlockSpec(memory_space=pl.ANY)],  # table stays in HBM
            out_specs=pl.BlockSpec((tile, E), lambda i, ids: (i, 0)),
            scratch_shapes=[
                pltpu.VMEM((tile, E), embed_table.dtype),  # gather landing buffer
                pltpu.SemaphoreType.DMA,                   # shared row-DMA semaphore
            ],
        ),
        compiler_params=pltpu.CompilerParams(
            dimension_semantics=("parallel",),             # shard token tiles on v7x
        ),
    )(flat_ids, embed_table)

    if n_tok_p != n_tok:
        out = out[:n_tok]
    return out.reshape(B, S, E)


if __name__ == "__main__":
    # Small shapes consistent with the module (embed_dim default = 512).
    batch, seq = 2, 8
    vocab_size, embed_dim = 64, 512

    key = jax.random.PRNGKey(0)
    k_emb, k_ids, k_ids2 = jax.random.split(key, 3)

    # nn.Embedding default init: N(0, 1).
    embed_table = jax.random.normal(k_emb, (vocab_size, embed_dim), dtype=jnp.float32)
    token_ids = jax.random.randint(k_ids, (batch, seq), 0, vocab_size, dtype=jnp.int32)

    y = text_embed(token_ids, embed_table)
    y = jax.block_until_ready(y)

    # Reference check (== torch.nn.Embedding semantics); DMA gather is exact.
    y_ref = embed_table[token_ids]
    assert y.shape == (batch, seq, embed_dim)
    assert jnp.array_equal(y, y_ref), "Pallas embedding gather mismatch"

    # Second check exercising a multi-step grid with token padding (grid=2).
    token_ids2 = jax.random.randint(k_ids2, (2, 96), 0, vocab_size, dtype=jnp.int32)
    y2 = jax.block_until_ready(text_embed(token_ids2, embed_table))
    assert jnp.array_equal(y2, embed_table[token_ids2]), "tiled-grid gather mismatch"

    print("KERNEL_OK")
</pallas_src>

<mosaic_0001>
module attributes {stable_mosaic.version = 11 : i64} {
  func.func @_embed_gather_kernel(%arg0: i32, %arg1: memref<16xi32, #tpu.memory_space<smem>>, %arg2: memref<64x512xf32, #tpu.memory_space<any>>, %arg3: memref<16x512xf32, #tpu.memory_space<vmem>>, %arg4: memref<16x512xf32, #tpu.memory_space<vmem>>, %arg5: memref<!tpu.dma_semaphore, #tpu.memory_space<semaphore_mem>>) attributes {dimension_semantics = [#tpu.dimension_semantics<parallel>], iteration_bounds = array<i64: 1>, scalar_prefetch = 1 : i64, scratch_operands = 2 : i64, tpu.core_type = #tpu.core_type<tc>, window_params = [{}, {transform_indices = @transform_1, window_bounds = array<i64: 16, 512>}]} {
    %c16_i32 = arith.constant 16 : i32
    %0 = arith.muli %arg0, %c16_i32 : i32
    %c0_i32 = arith.constant 0 : i32
    %c16_i32_0 = arith.constant 16 : i32
    %1 = arith.addi %c0_i32, %c16_i32_0 : i32
    %c1_i32 = arith.constant 1 : i32
    scf.for %arg6 = %c0_i32 to %1 step %c1_i32  : i32 {
      %c1_i32_9 = arith.constant 1 : i32
      %5 = arith.muli %arg6, %c1_i32_9 : i32
      %c0_i32_10 = arith.constant 0 : i32
      %6 = arith.addi %c0_i32_10, %5 : i32
      %7 = arith.addi %0, %6 : i32
      %8 = arith.index_cast %7 : i32 to index
      %9 = memref.load %arg1[%8] : memref<16xi32, #tpu.memory_space<smem>>
      %c0_i32_11 = arith.constant 0 : i32
      %10 = tpu.memref_slice %arg2[%9, %c0_i32_11] : memref<64x512xf32, #tpu.memory_space<any>> -> memref<1x512xf32, #tpu.memory_space<any>>
      %c0_i32_12 = arith.constant 0 : i32
      %11 = tpu.memref_slice %arg4[%6, %c0_i32_12] : memref<16x512xf32, #tpu.memory_space<vmem>> -> memref<1x512xf32, #tpu.memory_space<vmem>>
      tpu.enqueue_dma source(%10 : memref<1x512xf32, #tpu.memory_space<any>>) target(%11 : memref<1x512xf32, #tpu.memory_space<vmem>>) target_semaphore(%arg5 : memref<!tpu.dma_semaphore, #tpu.memory_space<semaphore_mem>>)
    }
    %c16_i32_1 = arith.constant 16 : i32
    %c0_i32_2 = arith.constant 0 : i32
    %c16_i32_3 = arith.constant 16 : i32
    %2 = arith.addi %c0_i32_2, %c16_i32_3 : i32
    %c1_i32_4 = arith.constant 1 : i32
    scf.for %arg6 = %c0_i32_2 to %2 step %c1_i32_4  : i32 {
      %c1_i32_9 = arith.constant 1 : i32
      %5 = arith.muli %arg6, %c1_i32_9 : i32
      %c0_i32_10 = arith.constant 0 : i32
      %6 = arith.addi %c0_i32_10, %5 : i32
      %7 = arith.addi %0, %6 : i32
      %8 = arith.index_cast %7 : i32 to index
      %9 = memref.load %arg1[%8] : memref<16xi32, #tpu.memory_space<smem>>
      %c0_i32_11 = arith.constant 0 : i32
      %10 = tpu.memref_slice %arg2[%9, %c0_i32_11] : memref<64x512xf32, #tpu.memory_space<any>> -> memref<1x512xf32, #tpu.memory_space<any>>
      %c0_i32_12 = arith.constant 0 : i32
      %11 = tpu.memref_slice %arg4[%6, %c0_i32_12] : memref<16x512xf32, #tpu.memory_space<vmem>> -> memref<1x512xf32, #tpu.memory_space<vmem>>
      tpu.wait_dma2 semaphore(%arg5 : memref<!tpu.dma_semaphore, #tpu.memory_space<semaphore_mem>>) src(%10 : memref<1x512xf32, #tpu.memory_space<any>>) dst(%11 : memref<1x512xf32, #tpu.memory_space<vmem>>)
    }
    %c16_i32_5 = arith.constant 16 : i32
    %c0 = arith.constant 0 : index
    %c0_6 = arith.constant 0 : index
    %3 = vector.load %arg4[%c0, %c0_6] : memref<16x512xf32, #tpu.memory_space<vmem>>, vector<16x512xf32>
    %c0_7 = arith.constant 0 : index
    %c0_8 = arith.constant 0 : index
    %4 = vector.load %arg3[%c0_7, %c0_8] : memref<16x512xf32, #tpu.memory_space<vmem>>, vector<16x512xf32>
    tpu.vector_store %arg3[%c0_7, %c0_8], %3 {strides = array<i32>} : memref<16x512xf32, #tpu.memory_space<vmem>>, vector<16x512xf32>,
    return
  }
  func.func @transform_1(%arg0: i32, %arg1: memref<16xi32, #tpu.memory_space<smem>>) -> (i32, i32) {
    %c0_i32 = arith.constant 0 : i32
    %c0_i32_0 = arith.constant 0 : i32
    return %arg0, %c0_i32 : i32, i32
  }
}

</mosaic_0001>

<llo_original>
// kernel: tpu_custom_call.1
$region0: #{tpu_custom_call.1}
  #allocation0 [shape = 'u32[]', space=smem, size = 0x4, offset = 0x4, fixed_abs, tag = 'smem constant byte address 0x4 - core index']
  #allocation1 [shape = 'u32[144,128]{1,0:T(1,128)}', space=vmem, size = 0x12000, scoped, tag = 'internal scratch']
  #allocation2 [shape = 'f32[16,512]{1,0:T(8,128)}', space=vmem, size = 0x8000, scoped, tag = 'scratch operand']
  #allocation3 [shape = 's32[1]{0}', space=sflag, size = 0x4, scoped, tag = 'scratch operand']
  #allocation4 [shape = 's32[1]{0}', space=sflag, size = 0x4, scoped, tag = 'scoped memory for tpu_custom_call.1']
  #allocation5 [shape = 'u8[512]{0}', space=smem, size = 0x200, scoped, tag = 'prefetched SMEM operand 0']
  #allocation8 [shape = 's32[]', space=sflag, size = 0x4, offset = 0, fixed_abs, tag = 'sflag constant byte address 0x0 - dummy sync flag']
  %s0 = inlined_call_operand.hbm [shape: s32[16], index: 0, kind: input, shape index: {}]
  %s1 = inlined_call_operand.hbm [shape: f32[64,512], index: 1, kind: input, shape index: {}]
  %s2 = inlined_call_operand.hbm [shape: f32[16,512], index: 2, kind: output, shape index: {}]
  %s3 = sld [smem:[#allocation0]]
  $region24: #{tpu_custom_call.1} parent=0
    _
  %s5 = ssub.s32 1, %s3
  %s6 = scalar_select 0, %s5, %s3
  %8 = dma.hbm_to_smem %s0, 16, [#allocation5], [#allocation4]
  %9 = dma.done [#allocation4], 16
  %10 = sfence
  $region1: #{tpu_custom_call.1} parent=0
    #allocation6 [shape = 'u8[32768]{0}', space=vmem, size = 0x8000, scoped, tag = 'output window, operand 0, single buffered']
    #allocation7 [shape = 's32[1]{0}', space=sflag, size = 0x4, scoped, tag = 'scoped memory for tpu_custom_call.1']
    %11 = vsyncpa [#allocation7], 0
    %s12 = smul.u32 0, 16
    loop: start=0, step=1, limit=16
    $region2: #{tpu_custom_call.1} parent=1 // loop_pre_header
      _
    $region3: #{tpu_custom_call.1} parent=1 // loop_header
      %s14 = sphi 0, %s18
      %p15 = scmp.ge.s32.totalorder %s14, 16
    $region4: #{tpu_custom_call.1} parent=1 // loop_header_branch
      %17 = sbr.rel (%p15) target = $region8
    $region5: #{tpu_custom_call.1} parent=1 // loop_body
      %s19 = sadd.s32 %s12, %s14
      %s20 = sld [smem:[#allocation5 + %s19]]
      %s21 = sshrl.u32 %s20, 3
      %s22 = sand.u32 %s20, 7
      %s23 = smul.u32 %s21, 32
      %s24 = sadd.s32 %s22, %s23
      %s25 = smul.addr %s24, 16
      %s26 = scalar_lea.hbm %s1, %s25
      %s27 = sshrl.u32 %s14, 3
      %s28 = sand.u32 %s14, 7
      %s29 = smul.u32 %s27, 32
      %s30 = sadd.s32 %s28, %s29
      %s31 = scalar_lea.vmem [#allocation2], %s30
      %s33 = sshll.u32 %s31, 4
      %s34 = int_to_ptr.vmem [resolvable:$true] %s33
      %36 = dma.hbm_to_vmem [thread:$0]  %s26, 64, %s34, [#allocation3], 128, 128, 1
    $region6: #{tpu_custom_call.1} parent=1 // loop_footer
      %s18 = sadd.s32 1, %s14
    $region7: #{tpu_custom_call.1} parent=1 // loop_footer_branch
      %13 = sbr.rel target = $region3
    $region8: #{tpu_custom_call.1} parent=1 // loop_exit
      _
    loop: start=0, step=1, limit=16
    $region9: #{tpu_custom_call.1} parent=1 // loop_pre_header
      _
    $region10: #{tpu_custom_call.1} parent=1 // loop_header
      %s38 = sphi 0, %s42
      %p39 = scmp.ge.s32.totalorder %s38, 16
    $region11: #{tpu_custom_call.1} parent=1 // loop_header_branch
      %41 = sbr.rel (%p39) target = $region15
    $region12: #{tpu_custom_call.1} parent=1 // loop_body
      %s43 = sadd.s32 %s12, %s38
      %s44 = sld [smem:[#allocation5 + %s43]]
      %s45 = smul.u32 1, 4
      %s46 = sshll.u32 %s45, 4
      %47 = dma.done [#allocation3], %s46
    $region13: #{tpu_custom_call.1} parent=1 // loop_footer
      %s42 = sadd.s32 1, %s38
    $region14: #{tpu_custom_call.1} parent=1 // loop_footer_branch
      %37 = sbr.rel target = $region10
    $region15: #{tpu_custom_call.1} parent=1 // loop_exit
      _
    %v48 = vld [vmem:[#allocation2] sm:$0xff]
    %v49 = vld [vmem:[#allocation2 + $0x8] sm:$0xff]
    %v50 = vld [vmem:[#allocation2 + $0x10] sm:$0xff]
    %v51 = vld [vmem:[#allocation2 + $0x18] sm:$0xff]
    %v52 = vld [vmem:[#allocation2 + $0x20] sm:$0xff]
    %v53 = vld [vmem:[#allocation2 + $0x28] sm:$0xff]
    %v54 = vld [vmem:[#allocation2 + $0x30] sm:$0xff]
    %v55 = vld [vmem:[#allocation2 + $0x38] sm:$0xff]
    %56 = vst [vmem:[#allocation6] sm:$0xff] %v48
    %57 = vst [vmem:[#allocation6 + $0x8] sm:$0xff] %v49
    %58 = vst [vmem:[#allocation6 + $0x10] sm:$0xff] %v50
    %59 = vst [vmem:[#allocation6 + $0x18] sm:$0xff] %v51
    %60 = vst [vmem:[#allocation6 + $0x20] sm:$0xff] %v52
    %61 = vst [vmem:[#allocation6 + $0x28] sm:$0xff] %v53
    %62 = vst [vmem:[#allocation6 + $0x30] sm:$0xff] %v54
    %63 = vst [vmem:[#allocation6 + $0x38] sm:$0xff] %v55
    // Predicated region
    $region16: #{tpu_custom_call.1} parent=1 // pred_check
      _
    $region17: #{tpu_custom_call.1} parent=1 // pred_check_branch
      %65 = sbr.rel (0) target = $region19
    $region18: #{tpu_custom_call.1} parent=1 // pred_region
      %s67 = ssub.s32 1024, 1024
      %68 = vsyncadd [#allocation7], %s67
      %s69 = sshll.u32 [#allocation6], 4
      %s70 = int_to_ptr.vmem [resolvable:$true] %s69
      %75 = dma.vmem_to_hbm [thread:$0]  %s70, 1024, %s2, [#allocation7], 512, 512, 32
    $region19: #{tpu_custom_call.1} parent=1 // pred_fallthru
      _
    // Predicated region
    $region20: #{tpu_custom_call.1} parent=1 // pred_check
      _
    $region21: #{tpu_custom_call.1} parent=1 // pred_check_branch
      %77 = sbr.rel (0) target = $region23
    $region22: #{tpu_custom_call.1} parent=1 // pred_region
      %78 = dma.done [#allocation7], 1024
    $region23: #{tpu_custom_call.1} parent=1 // pred_fallthru
      _
    %79 = vsyncpa [#allocation7], 1
  %80 = vsyncmov [#allocation3]
  %s81 = vpop.sfrf %80
  %p82 = scmp.eq.s32.totalorder %s81, 0
  %p83 = pneg %p82
  %85 = shalt.err (%p83)

</llo_original>
